<compile_context>
chip_gen: v7x
topology: tpu7x:2x2x1
jax: 0.10.0
libtpu: 0.0.40
codegen_flags: <defaults>
</compile_context>

<pallas_src>
import jax
import jax.numpy as jnp
from jax.experimental import pallas as pl
from jax.experimental.pallas import tpu as pltpu


# ----------------------------------------------------------------------------
# small host-side helpers
# ----------------------------------------------------------------------------
def _cdiv(a, b):
    return -(-a // b)


def _round_up(a, b):
    return _cdiv(a, b) * b


def _vmem_capacity_bytes():
    """Per-core VMEM capacity; conservative (v7x) fallback if unqueryable."""
    try:
        cap = int(pltpu.get_tpu_info().vmem_capacity_bytes)
        if cap > 0:
            return cap
    except Exception:
        pass
    return 64 * 1024 * 1024


def _resident_spec(block_shape, index_map):
    """BlockSpec for a (mostly) grid-invariant operand: single-buffer it.

    Falls back to a plain (double-buffered) BlockSpec if this jax version does
    not accept pipeline_mode / Buffered at construction time.
    """
    try:
        return pl.BlockSpec(block_shape, index_map, pipeline_mode=pl.Buffered(1))
    except Exception:
        return pl.BlockSpec(block_shape, index_map)


# ----------------------------------------------------------------------------
# kernel
# ----------------------------------------------------------------------------
def _make_highway_kernel(w_dtype, split_residual):
    """Build the fused highway kernel.

    Per grid step (row tile i, column tile j):
      x      : (tm, D)    full-feature activation rows (matmul operand)
      x_res  : (tm, tn)   the same rows, column slice j (residual path); equal
                          to x when there is no column tiling
      wt, wh : (D, tn)    pre-transposed weight column slices (mxu dtype)
      bt, bh : (1, tn)    f32 bias column slices
      out    : (tm, tn)
    """
    w_dtype = jnp.dtype(w_dtype)

    def _body(x, x_res, wt_ref, wh_ref, bt_ref, bh_ref, o_ref):
        xm = x.astype(w_dtype)                              # bf16 feed for the MXU
        zt = jnp.dot(xm, wt_ref[...], preferred_element_type=jnp.float32)
        zh = jnp.dot(xm, wh_ref[...], preferred_element_type=jnp.float32)
        zt = zt + bt_ref[...]                               # f32 bias, f32 acc
        zh = zh + bh_ref[...]
        t = jax.nn.sigmoid(zt)                              # transform gate
        h = jnp.maximum(zh, 0.0)                            # ReLU branch
        xf = x_res.astype(jnp.float32)                      # residual stays f32
        o_ref[...] = (xf + t * (h - xf)).astype(o_ref.dtype)  # == h*t + x*(1-t)

    if split_residual:
        def kernel(x_ref, xcol_ref, wt_ref, wh_ref, bt_ref, bh_ref, o_ref):
            _body(x_ref[...], xcol_ref[...], wt_ref, wh_ref, bt_ref, bh_ref, o_ref)
    else:
        def kernel(x_ref, wt_ref, wh_ref, bt_ref, bh_ref, o_ref):
            x = x_ref[...]
            _body(x, x, wt_ref, wh_ref, bt_ref, bh_ref, o_ref)

    return kernel


# ----------------------------------------------------------------------------
# parameter fusion (hoisted out of the per-call path)
# ----------------------------------------------------------------------------
def fuse_highway_params(wh, bh, wt, bt, *, mxu_dtype=jnp.bfloat16):
    """Pre-transpose / cast the Linear weights once per parameter update.

    Weights use torch.nn.Linear layout: W [out, in], b [out].
    mxu_dtype=None keeps the original weight dtype (exact path).
    """
    wh = jnp.asarray(wh)
    wt = jnp.asarray(wt)
    d = wh.shape[0]
    w_dt = wh.dtype if mxu_dtype is None else jnp.dtype(mxu_dtype)
    return {
        "wt_t": wt.T.astype(w_dt),                       # (D, D)
        "wh_t": wh.T.astype(w_dt),                       # (D, D)
        "bt": jnp.asarray(bt, jnp.float32).reshape(1, d),
        "bh": jnp.asarray(bh, jnp.float32).reshape(1, d),
    }


# ----------------------------------------------------------------------------
# forward
# ----------------------------------------------------------------------------
def highway_layer_fused(x, params, *, tm=None, tn=None, vmem_limit_bytes=None):
    """HighwayLayer.forward for x of shape [..., D] using pre-fused params."""
    wt_t, wh_t = params["wt_t"], params["wh_t"]
    bt, bh = params["bt"], params["bh"]

    orig_shape = x.shape
    d = orig_shape[-1]
    assert wt_t.shape == (d, d) and wh_t.shape == (d, d)
    x2 = x.reshape(-1, d)
    n = x2.shape[0]

    x_isz = jnp.dtype(x.dtype).itemsize
    w_isz = jnp.dtype(wt_t.dtype).itemsize
    pack = {4: 8, 2: 16, 1: 32}.get(x_isz, 8)            # sublane pack for x dtype

    # --- generation-aware VMEM budget -------------------------------------
    vmem_cap = _vmem_capacity_bytes()
    if vmem_limit_bytes is None:
        vmem_limit_bytes = min(3 * vmem_cap // 4, 100 * 1024 * 1024)
    vmem_limit_bytes = int(vmem_limit_bytes)

    # --- column tiling (large-D escape hatch; needs lane-aligned D) --------
    if tn is None:
        tn = d
        if d % 128 == 0:
            # keep the two resident weight slices under ~1/3 of the VMEM limit
            while 2 * d * tn * w_isz > vmem_limit_bytes // 3 and tn % 256 == 0:
                tn //= 2
    if tn != d:
        if d % tn != 0 or tn % 128 != 0:
            raise ValueError(f"tn={tn} must divide D={d} and be a multiple of 128")
    n_col = d // tn

    # --- row tiling ---------------------------------------------------------
    if tm is None:
        tm_hw_cap = 512 if vmem_cap <= 64 * 1024 * 1024 else 1024
        resident = 2 * d * tn * w_isz + 2 * 4 * tn        # single-buffered W + b
        budget = max(vmem_limit_bytes - resident - (2 << 20), 1 << 20)
        per_row = (2 * d * x_isz                          # x (double buffered)
                   + 2 * tn * x_isz                       # out (double buffered)
                   + (2 * tn * x_isz if n_col > 1 else 0) # residual x slice
                   + 2 * d                                # bf16 xm copy
                   + 4 * (d + 4 * tn))                    # f32 intermediates
        tm = max(pack, (budget // per_row) // pack * pack)
        tm = min(tm, tm_hw_cap)
        # keep >= ~8 row steps so the DMA pipeline (and both v7x cores) have work
        tm = min(tm, max(pack, _round_up(_cdiv(n, 8), pack)))
    else:
        tm = max(pack, _round_up(int(tm), pack))
    n_row = _cdiv(n, tm)                                  # ragged tail handled by masking

    # --- specs --------------------------------------------------------------
    # grid = (columns, rows): rows are the fast (inner) axis, so each weight
    # column slice is DMA'd once and stays resident across the whole row sweep.
    grid = (n_col, n_row)
    split_residual = n_col > 1

    in_specs = [pl.BlockSpec((tm, d), lambda j, i: (i, 0))]       # x rows (pipelined)
    inputs = [x2]
    if split_residual:
        in_specs.append(pl.BlockSpec((tm, tn), lambda j, i: (i, j)))  # residual slice
        inputs.append(x2)
    in_specs += [
        _resident_spec((d, tn), lambda j, i: (0, j)),             # Wt.T column slice
        _resident_spec((d, tn), lambda j, i: (0, j)),             # Wh.T column slice
        _resident_spec((1, tn), lambda j, i: (0, j)),             # bt slice (f32)
        _resident_spec((1, tn), lambda j, i: (0, j)),             # bh slice (f32)
    ]
    inputs += [wt_t, wh_t, bt, bh]

    kernel = _make_highway_kernel(w_dtype=wt_t.dtype, split_residual=split_residual)

    out = pl.pallas_call(
        kernel,
        out_shape=jax.ShapeDtypeStruct((n, d), x.dtype),
        grid_spec=pltpu.PrefetchScalarGridSpec(
            num_scalar_prefetch=0,
            grid=grid,
            in_specs=in_specs,
            out_specs=pl.BlockSpec((tm, tn), lambda j, i: (i, j)),
        ),
        compiler_params=pltpu.CompilerParams(
            dimension_semantics=("parallel", "parallel"),
            vmem_limit_bytes=vmem_limit_bytes,
        ),
    )(*inputs)

    return out.reshape(orig_shape)


def highway_layer(x, wh, bh, wt, bt, *, mxu_dtype=jnp.bfloat16, **tile_kwargs):
    """Convenience wrapper (fuses params per call; prefer fuse_highway_params)."""
    params = fuse_highway_params(wh, bh, wt, bt, mxu_dtype=mxu_dtype)
    return highway_layer_fused(x, params, **tile_kwargs)


# ----------------------------------------------------------------------------
# pure-JAX reference (matches PyTorch HighwayLayer.forward, f32 matmuls)
# ----------------------------------------------------------------------------
def highway_layer_ref(x, wh, bh, wt, bt):
    hp = jax.lax.Precision.HIGHEST
    t = jax.nn.sigmoid(jnp.dot(x, wt.T, precision=hp) + bt)
    h = jnp.maximum(jnp.dot(x, wh.T, precision=hp) + bh, 0.0)
    return h * t + x * (1.0 - t)


if __name__ == "__main__":
    key = jax.random.PRNGKey(0)
    (k_x, k_hw, k_hb, k_tw, k_tb,
     k_x2, k_x3, k_hw2, k_hb2, k_tw2, k_tb2) = jax.random.split(key, 11)

    # ---- Case A: small MCAN-like shape (batch=2, seq=8, hidden=32) ----------
    batch, seq, dim_hidden = 2, 8, 32
    scale = 1.0 / jnp.sqrt(dim_hidden)
    x = jax.random.normal(k_x, (batch, seq, dim_hidden), jnp.float32)
    wh = jax.random.uniform(k_hw, (dim_hidden, dim_hidden), jnp.float32, -scale, scale)
    bh = jax.random.uniform(k_hb, (dim_hidden,), jnp.float32, -scale, scale)
    wt = jax.random.uniform(k_tw, (dim_hidden, dim_hidden), jnp.float32, -scale, scale)
    bt = jax.random.uniform(k_tb, (dim_hidden,), jnp.float32, -scale, scale)
    ref = highway_layer_ref(x, wh, bh, wt, bt)

    # default bf16-MXU path (params fused once, reused across calls)
    params_bf16 = fuse_highway_params(wh, bh, wt, bt)
    out_bf16 = jax.block_until_ready(highway_layer_fused(x, params_bf16))
    assert out_bf16.shape == x.shape and out_bf16.dtype == x.dtype
    assert jnp.allclose(out_bf16, ref, atol=1e-1, rtol=1e-1), "bf16 path mismatch (small)"

    # exact f32-MXU path
    params_f32 = fuse_highway_params(wh, bh, wt, bt, mxu_dtype=None)
    out_f32 = jax.block_until_ready(highway_layer_fused(x, params_f32))
    assert jnp.allclose(out_f32, ref, atol=1e-5, rtol=1e-5), "f32 path mismatch (small)"

    # ---- Case B: ragged row count -> masked tail block, no host-side pad ----
    x_big = jax.random.normal(k_x2, (3, 100, dim_hidden), jnp.float32)
    ref_big = highway_layer_ref(x_big, wh, bh, wt, bt)
    out_big = jax.block_until_ready(highway_layer_fused(x_big, params_f32))
    assert out_big.shape == x_big.shape
    assert jnp.allclose(out_big, ref_big, atol=1e-5, rtol=1e-5), "ragged-tail mismatch"

    # ---- Case C: column-tiled path (D=256, tn=128), ragged rows too ---------
    d2 = 256
    scale2 = 1.0 / jnp.sqrt(d2)
    x3 = jax.random.normal(k_x3, (2, 37, d2), jnp.float32)
    wh2 = jax.random.uniform(k_hw2, (d2, d2), jnp.float32, -scale2, scale2)
    bh2 = jax.random.uniform(k_hb2, (d2,), jnp.float32, -scale2, scale2)
    wt2 = jax.random.uniform(k_tw2, (d2, d2), jnp.float32, -scale2, scale2)
    bt2 = jax.random.uniform(k_tb2, (d2,), jnp.float32, -scale2, scale2)
    ref3 = highway_layer_ref(x3, wh2, bh2, wt2, bt2)

    p2_f32 = fuse_highway_params(wh2, bh2, wt2, bt2, mxu_dtype=None)
    out3_full = jax.block_until_ready(highway_layer_fused(x3, p2_f32))            # tn = D
    out3_tiled = jax.block_until_ready(highway_layer_fused(x3, p2_f32, tn=128))   # 2 col tiles
    assert jnp.allclose(out3_full, ref3, atol=1e-4, rtol=1e-4), "f32 mismatch (D=256)"
    assert jnp.allclose(out3_tiled, out3_full, atol=1e-5, rtol=1e-5), "column tiling mismatch"

    p2_bf16 = fuse_highway_params(wh2, bh2, wt2, bt2)
    out3_bf16 = jax.block_until_ready(highway_layer_fused(x3, p2_bf16, tn=128, tm=64))
    assert jnp.allclose(out3_bf16, ref3, atol=1e-1, rtol=1e-1), "bf16 mismatch (D=256, tiled)"

    print("KERNEL_OK")
</pallas_src>

<mosaic_0001>
module attributes {stable_mosaic.version = 11 : i64} {
  func.func @kernel(%arg0: i32, %arg1: i32, %arg2: memref<8x32xf32, #tpu.memory_space<vmem>>, %arg3: memref<32x32xbf16, #tpu.memory_space<vmem>>, %arg4: memref<32x32xbf16, #tpu.memory_space<vmem>>, %arg5: memref<1x32xf32, #tpu.memory_space<vmem>>, %arg6: memref<1x32xf32, #tpu.memory_space<vmem>>, %arg7: memref<8x32xf32, #tpu.memory_space<vmem>>) attributes {dimension_semantics = [#tpu.dimension_semantics<parallel>, #tpu.dimension_semantics<parallel>], iteration_bounds = array<i64: 1, 2>, scalar_prefetch = 0 : i64, scratch_operands = 0 : i64, tpu.core_type = #tpu.core_type<tc>, window_params = [{transform_indices = @transform_0, window_bounds = array<i64: 8, 32>}, {pipeline_mode = #tpu.pipeline_mode<synchronous>, transform_indices = @transform_1, window_bounds = array<i64: 32, 32>}, {pipeline_mode = #tpu.pipeline_mode<synchronous>, transform_indices = @transform_2, window_bounds = array<i64: 32, 32>}, {pipeline_mode = #tpu.pipeline_mode<synchronous>, transform_indices = @transform_3, window_bounds = array<i64: 1, 32>}, {pipeline_mode = #tpu.pipeline_mode<synchronous>, transform_indices = @transform_4, window_bounds = array<i64: 1, 32>}, {transform_indices = @transform_5, window_bounds = array<i64: 8, 32>}]} {
    %c0 = arith.constant 0 : index
    %c0_0 = arith.constant 0 : index
    %0 = vector.load %arg2[%c0, %c0_0] : memref<8x32xf32, #tpu.memory_space<vmem>>, vector<8x32xf32>
    %1 = arith.truncf %0 : vector<8x32xf32> to vector<8x32xbf16>
    %c0_1 = arith.constant 0 : index
    %c0_2 = arith.constant 0 : index
    %2 = vector.load %arg3[%c0_1, %c0_2] : memref<32x32xbf16, #tpu.memory_space<vmem>>, vector<32x32xbf16>
    %cst = arith.constant dense<0.000000e+00> : vector<8x32xf32>
    %3 = tpu.matmul %1, %2, %cst {dimension_numbers = #tpu.dot_dimension_numbers<[1], [0], [0], [1], [0, 0, 1, 1], [], []>} : vector<8x32xbf16>, vector<32x32xbf16>, vector<8x32xf32> -> vector<8x32xf32>
    %c0_3 = arith.constant 0 : index
    %c0_4 = arith.constant 0 : index
    %4 = vector.load %arg4[%c0_3, %c0_4] : memref<32x32xbf16, #tpu.memory_space<vmem>>, vector<32x32xbf16>
    %cst_5 = arith.constant dense<0.000000e+00> : vector<8x32xf32>
    %5 = tpu.matmul %1, %4, %cst_5 {dimension_numbers = #tpu.dot_dimension_numbers<[1], [0], [0], [1], [0, 0, 1, 1], [], []>} : vector<8x32xbf16>, vector<32x32xbf16>, vector<8x32xf32> -> vector<8x32xf32>
    %c0_6 = arith.constant 0 : index
    %c0_7 = arith.constant 0 : index
    %6 = vector.load %arg5[%c0_6, %c0_7] : memref<1x32xf32, #tpu.memory_space<vmem>>, vector<1x32xf32>
    %7 = vector.broadcast %6 : vector<1x32xf32> to vector<8x32xf32>
    %8 = arith.addf %3, %7 : vector<8x32xf32>
    %c0_8 = arith.constant 0 : index
    %c0_9 = arith.constant 0 : index
    %9 = vector.load %arg6[%c0_8, %c0_9] : memref<1x32xf32, #tpu.memory_space<vmem>>, vector<1x32xf32>
    %10 = vector.broadcast %9 : vector<1x32xf32> to vector<8x32xf32>
    %11 = arith.addf %5, %10 : vector<8x32xf32>
    %12 = arith.negf %8 : vector<8x32xf32>
    %13 = math.exp %12 : vector<8x32xf32>
    %cst_10 = arith.constant 1.000000e+00 : f32
    %14 = vector.broadcast %cst_10 : f32 to vector<8x32xf32>
    %15 = arith.addf %14, %13 : vector<8x32xf32>
    %16 = arith.divf %14, %15 : vector<8x32xf32>
    %cst_11 = arith.constant 0.000000e+00 : f32
    %17 = vector.broadcast %cst_11 : f32 to vector<8x32xf32>
    %18 = arith.maximumf %11, %17 : vector<8x32xf32>
    %19 = arith.subf %18, %0 : vector<8x32xf32>
    %20 = arith.mulf %16, %19 : vector<8x32xf32>
    %21 = arith.addf %0, %20 : vector<8x32xf32>
    %c0_12 = arith.constant 0 : index
    %c0_13 = arith.constant 0 : index
    %22 = vector.load %arg7[%c0_12, %c0_13] : memref<8x32xf32, #tpu.memory_space<vmem>>, vector<8x32xf32>
    tpu.vector_store %arg7[%c0_12, %c0_13], %21 {strides = array<i32>} : memref<8x32xf32, #tpu.memory_space<vmem>>, vector<8x32xf32>,
    return
  }
  func.func @transform_0(%arg0: i32, %arg1: i32) -> (i32, i32) {
    %c0_i32 = arith.constant 0 : i32
    %c0_i32_0 = arith.constant 0 : i32
    return %arg1, %c0_i32 : i32, i32
  }
  func.func @transform_1(%arg0: i32, %arg1: i32) -> (i32, i32) {
    %c0_i32 = arith.constant 0 : i32
    %c0_i32_0 = arith.constant 0 : i32
    return %c0_i32, %arg0 : i32, i32
  }
  func.func @transform_2(%arg0: i32, %arg1: i32) -> (i32, i32) {
    %c0_i32 = arith.constant 0 : i32
    %c0_i32_0 = arith.constant 0 : i32
    return %c0_i32, %arg0 : i32, i32
  }
  func.func @transform_3(%arg0: i32, %arg1: i32) -> (i32, i32) {
    %c0_i32 = arith.constant 0 : i32
    %c0_i32_0 = arith.constant 0 : i32
    return %c0_i32, %arg0 : i32, i32
  }
  func.func @transform_4(%arg0: i32, %arg1: i32) -> (i32, i32) {
    %c0_i32 = arith.constant 0 : i32
    %c0_i32_0 = arith.constant 0 : i32
    return %c0_i32, %arg0 : i32, i32
  }
  func.func @transform_5(%arg0: i32, %arg1: i32) -> (i32, i32) {
    %c0_i32 = arith.constant 0 : i32
    return %arg1, %arg0 : i32, i32
  }
}

</mosaic_0001>

<llo_original>
// kernel: tpu_custom_call.1
$region0: #{tpu_custom_call.1}
  #allocation0 [shape = 'u32[]', space=smem, size = 0x4, offset = 0x4, fixed_abs, tag = 'smem constant byte address 0x4 - core index']
  #allocation1 [shape = 'u32[144,128]{1,0:T(1,128)}', space=vmem, size = 0x12000, scoped, tag = 'internal scratch']
  %s0 = inlined_call_operand.hbm [shape: f32[16,32], index: 0, kind: input, shape index: {}]
  %s1 = inlined_call_operand.hbm [shape: bf16[32,32], index: 1, kind: input, shape index: {}]
  %s2 = inlined_call_operand.hbm [shape: bf16[32,32], index: 2, kind: input, shape index: {}]
  %s3 = inlined_call_operand.vmem [shape: f32[1,32], index: 3, kind: input, shape index: {}]
  %s4 = inlined_call_operand.vmem [shape: f32[1,32], index: 4, kind: input, shape index: {}]
  %s5 = inlined_call_operand.hbm [shape: f32[16,32], index: 5, kind: output, shape index: {}]
  %s6 = sld [smem:[#allocation0]]
  $region65: #{tpu_custom_call.1} parent=0
    _
  %s8 = ssub.s32 1, %s6
  %s9 = scalar_select 0, %s8, %s6
  $region1: #{tpu_custom_call.1} parent=0
    #allocation2 [shape = 'u8[8192]{0}', space=vmem, size = 0x2000, scoped, tag = 'input window, operand 0']
    #allocation3 [shape = 's32[2]{0}', space=sflag, size = 0x8, scoped, tag = 'scoped memory for tpu_custom_call.1']
    #allocation4 [shape = 's32[2]{0}', space=sflag, size = 0x8, scoped, tag = 'scoped memory for tpu_custom_call.1']
    #allocation5 [shape = 'u8[8192]{0}', space=vmem, size = 0x2000, scoped, tag = 'input window, operand 1, single buffered']
    #allocation6 [shape = 's32[1]{0}', space=sflag, size = 0x4, scoped, tag = 'scoped memory for tpu_custom_call.1']
    #allocation7 [shape = 'u8[8192]{0}', space=vmem, size = 0x2000, scoped, tag = 'input window, operand 2, single buffered']
    #allocation8 [shape = 'u8[8192]{0}', space=vmem, size = 0x2000, scoped, tag = 'output window, operand 0']
    %10 = vsyncpa [#allocation3], 0
    %s11 = scalar_lea.sflag [#allocation3], 1
    %12 = vsyncpa %s11, 0
    %13 = vsyncpa [#allocation6], 0
    %14 = vsyncpa [#allocation4], 0
    %s15 = scalar_lea.sflag [#allocation4], 1
    %16 = vsyncpa %s15, 0
    loop: start=0, step=1, limit=4
    $region2: #{tpu_custom_call.1} parent=1 // loop_pre_header
      _
    $region3: #{tpu_custom_call.1} parent=1 // loop_header
      %s18 = sphi 0, %s22
      %p19 = scmp.ge.s32.totalorder %s18, 4
      %s25 = sphi 0, %s37
      %s26 = sphi 0, %s33
      %s27 = sphi 0, %s25
      %s28 = sphi 0, %s26
      %s29 = sphi 0, %s27
      %s30 = sphi 0, %s28
      %s40 = sphi 0, %s42
      %s43 = sphi 0, %s40
      %s44 = sphi 0, %s43
      %s60 = sphi 0, %s44
      %s66 = sphi 0, %s68
      %s69 = sphi 0, %s66
      %s70 = sphi 0, %s69
      %s86 = sphi 0, %s70
      %s92 = sphi 0, %s94
      %s95 = sphi 0, %s92
      %s96 = sphi 0, %s95
      %s112 = sphi 0, %s96
      %s118 = sphi 0, %s120
      %s121 = sphi 0, %s118
      %s122 = sphi 0, %s121
      %s138 = sphi 0, %s122
      %s144 = sphi 0, %s146
      %s147 = sphi 0, %s144
      %s148 = sphi 0, %s147
      %s164 = sphi 0, %s148
      %s172 = sphi 0, %s174
      %s175 = sphi 0, %s172
      %s176 = sphi 0, %s175
      %s192 = sphi 0, %s176
    $region4: #{tpu_custom_call.1} parent=1 // loop_header_branch
      %21 = sbr.rel (%p19) target = $region8
    $region5: #{tpu_custom_call.1} parent=1 // loop_body
      %s23 = ssub.s32 %s18, 1
      %s24 = ssub.s32 %s18, 2
      %s31 = sadd.s32 1, %s26
      %p32 = scmp.ge.s32.totalorder %s31, 2
      %s33 = scalar_select %p32, 0, %s31
      %s34 = sadd.s32 1, %s25
      %s35 = scalar_select %p32, %s34, %s25
      %p36 = scmp.ge.s32.totalorder %s35, 1
      %s37 = scalar_select %p36, 0, %s35
      %s38 = ssub.s32 %s26, %s33
      %p39 = scmp.eq.s32.totalorder %s38, 0
      %s41 = sadd.s32 %s40, 1
      %s42 = scalar_select %p39, %s40, %s41
      %p45 = pneg %p39
      %p46 = scmp.eq.s32.totalorder %s18, 1
      %p47 = por %p45, %p46
      %p48 = scmp.ne.s32.totalorder %s40, %s43
      %p49 = scmp.eq.s32.totalorder %s18, 0
      %p50 = por %p48, %p49
      %p51 = scmp.ne.s32.totalorder %s40, %s43
      %p52 = scmp.eq.s32.totalorder %s23, 1
      %p53 = por %p51, %p52
      %p54 = scmp.ne.s32.totalorder %s43, %s44
      %p55 = scmp.eq.s32.totalorder %s23, 0
      %p56 = por %p54, %p55
      %p57 = scmp.ne.s32.totalorder %s43, %s44
      %p58 = scmp.eq.s32.totalorder %s24, 1
      %p59 = por %p57, %p58
      %p61 = scmp.ne.s32.totalorder %s44, %s60
      %p62 = scmp.eq.s32.totalorder %s24, 0
      %p63 = por %p61, %p62
      %s64 = ssub.s32 %s25, %s37
      %p65 = scmp.eq.s32.totalorder %s64, 0
      %s67 = sadd.s32 %s66, 1
      %s68 = scalar_select %p65, %s66, %s67
      %p71 = pneg %p65
      %p72 = scmp.eq.s32.totalorder %s18, 1
      %p73 = por %p71, %p72
      %p74 = scmp.ne.s32.totalorder %s66, %s69
      %p75 = scmp.eq.s32.totalorder %s18, 0
      %p76 = por %p74, %p75
      %p77 = scmp.ne.s32.totalorder %s66, %s69
      %p78 = scmp.eq.s32.totalorder %s23, 1
      %p79 = por %p77, %p78
      %p80 = scmp.ne.s32.totalorder %s69, %s70
      %p81 = scmp.eq.s32.totalorder %s23, 0
      %p82 = por %p80, %p81
      %p83 = scmp.ne.s32.totalorder %s69, %s70
      %p84 = scmp.eq.s32.totalorder %s24, 1
      %p85 = por %p83, %p84
      %p87 = scmp.ne.s32.totalorder %s70, %s86
      %p88 = scmp.eq.s32.totalorder %s24, 0
      %p89 = por %p87, %p88
      %s90 = ssub.s32 %s25, %s37
      %p91 = scmp.eq.s32.totalorder %s90, 0
      %s93 = sadd.s32 %s92, 1
      %s94 = scalar_select %p91, %s92, %s93
      %p97 = pneg %p91
      %p98 = scmp.eq.s32.totalorder %s18, 1
      %p99 = por %p97, %p98
      %p100 = scmp.ne.s32.totalorder %s92, %s95
      %p101 = scmp.eq.s32.totalorder %s18, 0
      %p102 = por %p100, %p101
      %p103 = scmp.ne.s32.totalorder %s92, %s95
      %p104 = scmp.eq.s32.totalorder %s23, 1
      %p105 = por %p103, %p104
      %p106 = scmp.ne.s32.totalorder %s95, %s96
      %p107 = scmp.eq.s32.totalorder %s23, 0
      %p108 = por %p106, %p107
      %p109 = scmp.ne.s32.totalorder %s95, %s96
      %p110 = scmp.eq.s32.totalorder %s24, 1
      %p111 = por %p109, %p110
      %p113 = scmp.ne.s32.totalorder %s96, %s112
      %p114 = scmp.eq.s32.totalorder %s24, 0
      %p115 = por %p113, %p114
      %s116 = ssub.s32 %s25, %s37
      %p117 = scmp.eq.s32.totalorder %s116, 0
      %s119 = sadd.s32 %s118, 1
      %s120 = scalar_select %p117, %s118, %s119
      %p123 = pneg %p117
      %p124 = scmp.eq.s32.totalorder %s18, 1
      %p125 = por %p123, %p124
      %p126 = scmp.ne.s32.totalorder %s118, %s121
      %p127 = scmp.eq.s32.totalorder %s18, 0
      %p128 = por %p126, %p127
      %p129 = scmp.ne.s32.totalorder %s118, %s121
      %p130 = scmp.eq.s32.totalorder %s23, 1
      %p131 = por %p129, %p130
      %p132 = scmp.ne.s32.totalorder %s121, %s122
      %p133 = scmp.eq.s32.totalorder %s23, 0
      %p134 = por %p132, %p133
      %p135 = scmp.ne.s32.totalorder %s121, %s122
      %p136 = scmp.eq.s32.totalorder %s24, 1
      %p137 = por %p135, %p136
      %p139 = scmp.ne.s32.totalorder %s122, %s138
      %p140 = scmp.eq.s32.totalorder %s24, 0
      %p141 = por %p139, %p140
      %s142 = ssub.s32 %s25, %s37
      %p143 = scmp.eq.s32.totalorder %s142, 0
      %s145 = sadd.s32 %s144, 1
      %s146 = scalar_select %p143, %s144, %s145
      %p149 = pneg %p143
      %p150 = scmp.eq.s32.totalorder %s18, 1
      %p151 = por %p149, %p150
      %p152 = scmp.ne.s32.totalorder %s144, %s147
      %p153 = scmp.eq.s32.totalorder %s18, 0
      %p154 = por %p152, %p153
      %p155 = scmp.ne.s32.totalorder %s144, %s147
      %p156 = scmp.eq.s32.totalorder %s23, 1
      %p157 = por %p155, %p156
      %p158 = scmp.ne.s32.totalorder %s147, %s148
      %p159 = scmp.eq.s32.totalorder %s23, 0
      %p160 = por %p158, %p159
      %p161 = scmp.ne.s32.totalorder %s147, %s148
      %p162 = scmp.eq.s32.totalorder %s24, 1
      %p163 = por %p161, %p162
      %p165 = scmp.ne.s32.totalorder %s148, %s164
      %p166 = scmp.eq.s32.totalorder %s24, 0
      %p167 = por %p165, %p166
      %s168 = ssub.s32 %s26, %s33
      %s169 = ssub.s32 %s25, %s37
      %s170 = sor.u32 %s168, %s169
      %p171 = scmp.eq.s32.totalorder %s170, 0
      %s173 = sadd.s32 %s172, 1
      %s174 = scalar_select %p171, %s172, %s173
      %p177 = pneg %p171
      %p178 = scmp.eq.s32.totalorder %s18, 1
      %p179 = por %p177, %p178
      %p180 = scmp.ne.s32.totalorder %s172, %s175
      %p181 = scmp.eq.s32.totalorder %s18, 0
      %p182 = por %p180, %p181
      %p183 = scmp.ne.s32.totalorder %s172, %s175
      %p184 = scmp.eq.s32.totalorder %s23, 1
      %p185 = por %p183, %p184
      %p186 = scmp.ne.s32.totalorder %s175, %s176
      %p187 = scmp.eq.s32.totalorder %s23, 0
      %p188 = por %p186, %p187
      %p189 = scmp.ne.s32.totalorder %s175, %s176
      %p190 = scmp.eq.s32.totalorder %s24, 1
      %p191 = por %p189, %p190
      %p193 = scmp.ne.s32.totalorder %s176, %s192
      %p194 = scmp.eq.s32.totalorder %s24, 0
      %p195 = por %p193, %p194
      %p196 = scmp.le.s32.totalorder 1, %s18
      %p197 = scmp.lt.s32.totalorder %s18, 3
      %p198 = pnand %p196, %p197
      %p199 = pneg %p198
      // Predicated region
      $region9: #{tpu_custom_call.1} parent=5 // pred_check
        _
      $region10: #{tpu_custom_call.1} parent=5 // pred_check_branch
        %201 = sbr.rel (%p198) target = $region12
      $region11: #{tpu_custom_call.1} parent=5 // pred_region
        %s202 = ssub.s32 %s18, 1
        // Predicated region
        $region13: #{tpu_custom_call.1} parent=11 // pred_check
          %p203 = pneg %p82
        $region14: #{tpu_custom_call.1} parent=11 // pred_check_branch
          %205 = sbr.rel (%p203) target = $region16
        $region15: #{tpu_custom_call.1} parent=11 // pred_region
          %s207 = ssub.s32 256, 256
          %208 = vsyncadd [#allocation6], %s207
          %s209 = smul.addr %s27, 64
          %s210 = scalar_lea.hbm %s1, %s209
          %s211 = sshll.u32 [#allocation5], 4
          %s212 = int_to_ptr.vmem [resolvable:$true] %s211
          %217 = dma.hbm_to_vmem [thread:$0]  %s210, 256, %s212, [#allocation6], 64, 64, 4
        $region16: #{tpu_custom_call.1} parent=11 // pred_fallthru
          _
        // Predicated region
        $region17: #{tpu_custom_call.1} parent=11 // pred_check
          %p218 = pneg %p108
        $region18: #{tpu_custom_call.1} parent=11 // pred_check_branch
          %220 = sbr.rel (%p218) target = $region20
        $region19: #{tpu_custom_call.1} parent=11 // pred_region
          %s222 = ssub.s32 256, 256
          %223 = vsyncadd [#allocation6], %s222
          %s224 = smul.addr %s27, 64
          %s225 = scalar_lea.hbm %s2, %s224
          %s226 = sshll.u32 [#allocation7], 4
          %s227 = int_to_ptr.vmem [resolvable:$true] %s226
          %232 = dma.hbm_to_vmem [thread:$0]  %s225, 256, %s227, [#allocation6], 64, 64, 4
        $region20: #{tpu_custom_call.1} parent=11 // pred_fallthru
          _
        // Predicated region
        $region21: #{tpu_custom_call.1} parent=11 // pred_check
          %p233 = pneg %p134
        $region22: #{tpu_custom_call.1} parent=11 // pred_check_branch
          %235 = sbr.rel (%p233) target = $region24
        $region23: #{tpu_custom_call.1} parent=11 // pred_region
          %p236 = scmp.lt.s32.totalorder %s27, 0
          %s237 = scalar_select %p236, %s27, 0
          %s238 = scalar_lea.vmem %s3, %s237
        $region24: #{tpu_custom_call.1} parent=11 // pred_fallthru
          _
        // Predicated region
        $region25: #{tpu_custom_call.1} parent=11 // pred_check
          %p239 = pneg %p160
        $region26: #{tpu_custom_call.1} parent=11 // pred_check_branch
          %241 = sbr.rel (%p239) target = $region28
        $region27: #{tpu_custom_call.1} parent=11 // pred_region
          %p242 = scmp.lt.s32.totalorder %s27, 0
          %s243 = scalar_select %p242, %s27, 0
          %s244 = scalar_lea.vmem %s4, %s243
        $region28: #{tpu_custom_call.1} parent=11 // pred_fallthru
          _
      $region12: #{tpu_custom_call.1} parent=5 // pred_fallthru
        _
      %p245 = scmp.lt.s32.totalorder %s18, 2
      // Predicated region
      $region29: #{tpu_custom_call.1} parent=5 // pred_check
        %p246 = pneg %p245
      $region30: #{tpu_custom_call.1} parent=5 // pred_check_branch
        %248 = sbr.rel (%p246) target = $region32
      $region31: #{tpu_custom_call.1} parent=5 // pred_region
        // Predicated region
        $region33: #{tpu_custom_call.1} parent=31 // pred_check
          %p249 = pneg %p50
        $region34: #{tpu_custom_call.1} parent=31 // pred_check_branch
          %251 = sbr.rel (%p249) target = $region36
        $region35: #{tpu_custom_call.1} parent=31 // pred_region
          %s252 = sand.u32 %s40, 1
          %s253 = scalar_lea.sflag [#allocation3], %s252
          %s254 = sand.u32 %s40, 1
          %s255 = smul.addr %s254, 8
          %s256 = scalar_lea.vmem [#allocation2], %s255
          %s258 = ssub.s32 128, 128
          %259 = vsyncadd %s253, %s258
          %s260 = smul.addr %s26, 128
          %s261 = scalar_lea.hbm %s0, %s260
          %s263 = sshll.u32 %s256, 4
          %s264 = int_to_ptr.vmem [resolvable:$true] %s263
          %266 = dma.hbm_to_vmem [thread:$0]  %s261, 128, %s264, %s253
        $region36: #{tpu_custom_call.1} parent=31 // pred_fallthru
          _
      $region32: #{tpu_custom_call.1} parent=5 // pred_fallthru
        _
      %p267 = scmp.le.s32.totalorder 1, %s18
      %p268 = scmp.lt.s32.totalorder %s18, 3
      %p269 = pnand %p267, %p268
      %p270 = pneg %p269
      // Predicated region
      $region37: #{tpu_custom_call.1} parent=5 // pred_check
        _
      $region38: #{tpu_custom_call.1} parent=5 // pred_check_branch
        %272 = sbr.rel (%p269) target = $region40
      $region39: #{tpu_custom_call.1} parent=5 // pred_region
        %s273 = ssub.s32 %s18, 1
        %s274 = sand.u32 %s43, 1
        %s275 = scalar_lea.sflag [#allocation3], %s274
        %s276 = sand.u32 %s43, 1
        %s277 = smul.addr %s276, 8
        %s278 = scalar_lea.vmem [#allocation2], %s277
        // Predicated region
        $region41: #{tpu_custom_call.1} parent=39 // pred_check
          %p279 = pneg %p56
        $region42: #{tpu_custom_call.1} parent=39 // pred_check_branch
          %281 = sbr.rel (%p279) target = $region44
        $region43: #{tpu_custom_call.1} parent=39 // pred_region
          %282 = dma.done %s275, 128
        $region44: #{tpu_custom_call.1} parent=39 // pred_fallthru
          _
        // Predicated region
        $region45: #{tpu_custom_call.1} parent=39 // pred_check
          %p283 = pneg %p82
        $region46: #{tpu_custom_call.1} parent=39 // pred_check_branch
          %285 = sbr.rel (%p283) target = $region48
        $region47: #{tpu_custom_call.1} parent=39 // pred_region
          %286 = dma.done [#allocation6], 256
        $region48: #{tpu_custom_call.1} parent=39 // pred_fallthru
          _
        // Predicated region
        $region49: #{tpu_custom_call.1} parent=39 // pred_check
          %p287 = pneg %p108
        $region50: #{tpu_custom_call.1} parent=39 // pred_check_branch
          %289 = sbr.rel (%p287) target = $region52
        $region51: #{tpu_custom_call.1} parent=39 // pred_region
          %290 = dma.done [#allocation6], 256
        $region52: #{tpu_custom_call.1} parent=39 // pred_fallthru
          _
        %s291 = sand.u32 %s43, 1
        %s292 = scalar_lea.sflag [#allocation3], %s291
        %s293 = sand.u32 %s43, 1
        %s294 = smul.addr %s293, 8
        %s295 = scalar_lea.vmem [#allocation2], %s294
        %p296 = pneg %p56
        %p297 = pneg %p53
        %p298 = pneg %p82
        %p299 = pneg %p79
        %p300 = pneg %p108
        %p301 = pneg %p105
        %p302 = scmp.lt.s32.totalorder %s27, 0
        %s303 = scalar_select %p302, %s27, 0
        %s304 = scalar_lea.vmem %s3, %s303
        %p305 = pneg %p134
        %p306 = pneg %p131
        %p307 = scmp.lt.s32.totalorder %s27, 0
        %s308 = scalar_select %p307, %s27, 0
        %s309 = scalar_lea.vmem %s4, %s308
        %p310 = pneg %p160
        %p311 = pneg %p157
        %p312 = pneg %p188
        %p313 = pneg %p185
        %s314 = sand.u32 %s175, 1
        %s315 = scalar_lea.sflag [#allocation4], %s314
        %s316 = sand.u32 %s175, 1
        %s317 = smul.addr %s316, 8
        %s318 = scalar_lea.vmem [#allocation8], %s317
        %p319 = scmp.lt.s32.totalorder %s27, 0
        %s320 = scalar_select %p319, %s27, 0
        %s321 = scalar_lea.vmem %s3, %s320
        %p322 = scmp.lt.s32.totalorder %s27, 0
        %s323 = scalar_select %p322, %s27, 0
        %s324 = scalar_lea.vmem %s4, %s323
        %v326 = vld [vmem:[%s278] sm:$0xff]
        %v327 = vpack.c.bf16 %v326, %v326
        %v328 = vld [vmem:[#allocation5] sm:$0xf]
        %v329 = vld [vmem:[#allocation5 + $0x4] sm:$0xf]
        %v330 = vld [vmem:[#allocation5 + $0x8] sm:$0xf]
        %v331 = vld [vmem:[#allocation5 + $0xc] sm:$0xf]
        %v332 = vld [vmem:[#allocation7] sm:$0xf]
        %v333 = vld [vmem:[#allocation7 + $0x4] sm:$0xf]
        %v334 = vld [vmem:[#allocation7 + $0x8] sm:$0xf]
        %v335 = vld [vmem:[#allocation7 + $0xc] sm:$0xf]
        %v336 = vld [vmem:[%s321] sm:$0x1]
        %v338 = vlaneseq
        %v339 = vshrl.u32 %v338, 7
        %v340 = vsub.s32 0, %v339
        %v341 = vrot.slane %v336, %v340
        %v347 = vunpack.c.l.b16 %v328
        %v348 = vunpack.c.l.b16 %v329
        %v349 = vunpack.c.l.b16 %v330
        %v350 = vunpack.c.l.b16 %v331
        %v351 = vpack.c.b16 %v348, %v347
        %v352 = vpack.c.b16 %v350, %v349
        %vm355 = vcmask 261120
        %v357 = vsel %vm355, %v327, 0
        %359 = vmatprep.subr.bf16.mxu0 0
        %360 = vmatpush1.bf16.msra.mxu0 %v351
        %361 = vmatprep.subr.bf16.mxu0 0
        %362 = vmatpush1.bf16.msra.mxu0 %v352
        %363 = vmatprep.subr.bf16.mxu0 0
        %364 = vmatpush1.bf16.msra.mxu0 0
        %365 = vmatprep.subr.bf16.mxu0 0
        %366 = vmatpush1.bf16.msra.mxu0 0
        %367 = vmatprep.subr.bf16.mxu0 0
        %368 = vmatpush1.bf16.msra.mxu0 0
        %369 = vmatprep.subr.bf16.mxu0 0
        %370 = vmatpush1.bf16.msra.mxu0 0
        %371 = vmatprep.subr.bf16.mxu0 0
        %372 = vmatpush1.bf16.msra.mxu0 0
        %373 = vmatprep.subr.bf16.mxu0 0
        %374 = vmatpush1.bf16.msra.mxu0 0
        %375 = vmatprep.subr.bf16.mxu0 0
        %376 = vmatpush1.bf16.msra.mxu0 0
        %377 = vmatprep.subr.bf16.mxu0 0
        %378 = vmatpush1.bf16.msra.mxu0 0
        %379 = vmatprep.subr.bf16.mxu0 0
        %380 = vmatpush1.bf16.msra.mxu0 0
        %381 = vmatprep.subr.bf16.mxu0 0
        %382 = vmatpush1.bf16.msra.mxu0 0
        %383 = vmatprep.subr.bf16.mxu0 0
        %384 = vmatpush1.bf16.msra.mxu0 0
        %385 = vmatprep.subr.bf16.mxu0 0
        %386 = vmatpush1.bf16.msra.mxu0 0
        %387 = vmatprep.subr.bf16.mxu0 0
        %388 = vmatpush1.bf16.msra.mxu0 0
        %389 = vmatprep.subr.bf16.mxu0 0
        %390 = vmatpush1.bf16.msra.mxu0 0
        %391 = vmatprep.mubr.bf16.mxu0 0
        %392 = vmatmul.mubr.bf16.gmra.mrb[0].mxu0 %v357
        %v393 = vpop.f32.mrb[0].mxu0
        %v394 = vadd.f32 %v341, %v393
        %v395 = vpop.f32.mrb[0].mxu0
        %v396 = vpop.f32.mrb[0].mxu0
        %v397 = vpop.f32.mrb[0].mxu0
        %398 = vdwg.mxu0
        %v399 = vld [vmem:[%s324] sm:$0x1]
        %v401 = vlaneseq
        %v402 = vshrl.u32 %v401, 7
        %v403 = vsub.s32 0, %v402
        %v404 = vrot.slane %v399, %v403
        %v410 = vunpack.c.l.b16 %v332
        %v411 = vunpack.c.l.b16 %v333
        %v412 = vunpack.c.l.b16 %v334
        %v413 = vunpack.c.l.b16 %v335
        %v414 = vpack.c.b16 %v411, %v410
        %v415 = vpack.c.b16 %v413, %v412
        %418 = vmatprep.subr.bf16.mxu0 0
        %419 = vmatpush1.bf16.msra.mxu0 %v414
        %420 = vmatprep.subr.bf16.mxu0 0
        %421 = vmatpush1.bf16.msra.mxu0 %v415
        %422 = vmatprep.subr.bf16.mxu0 0
        %423 = vmatpush1.bf16.msra.mxu0 0
        %424 = vmatprep.subr.bf16.mxu0 0
        %425 = vmatpush1.bf16.msra.mxu0 0
        %426 = vmatprep.subr.bf16.mxu0 0
        %427 = vmatpush1.bf16.msra.mxu0 0
        %428 = vmatprep.subr.bf16.mxu0 0
        %429 = vmatpush1.bf16.msra.mxu0 0
        %430 = vmatprep.subr.bf16.mxu0 0
        %431 = vmatpush1.bf16.msra.mxu0 0
        %432 = vmatprep.subr.bf16.mxu0 0
        %433 = vmatpush1.bf16.msra.mxu0 0
        %434 = vmatprep.subr.bf16.mxu0 0
        %435 = vmatpush1.bf16.msra.mxu0 0
        %436 = vmatprep.subr.bf16.mxu0 0
        %437 = vmatpush1.bf16.msra.mxu0 0
        %438 = vmatprep.subr.bf16.mxu0 0
        %439 = vmatpush1.bf16.msra.mxu0 0
        %440 = vmatprep.subr.bf16.mxu0 0
        %441 = vmatpush1.bf16.msra.mxu0 0
        %442 = vmatprep.subr.bf16.mxu0 0
        %443 = vmatpush1.bf16.msra.mxu0 0
        %444 = vmatprep.subr.bf16.mxu0 0
        %445 = vmatpush1.bf16.msra.mxu0 0
        %446 = vmatprep.subr.bf16.mxu0 0
        %447 = vmatpush1.bf16.msra.mxu0 0
        %448 = vmatprep.subr.bf16.mxu0 0
        %449 = vmatpush1.bf16.msra.mxu0 0
        %450 = vmatprep.mubr.bf16.mxu0 0
        %451 = vmatmul.mubr.bf16.gmra.mrb[0].mxu0 %v357
        %v452 = vpop.f32.mrb[0].mxu0
        %v453 = vadd.f32 %v404, %v452
        %v454 = vpop.f32.mrb[0].mxu0
        %v455 = vpop.f32.mrb[0].mxu0
        %v456 = vpop.f32.mrb[0].mxu0
        %457 = vdwg.mxu0
        %v458 = vxor.u32 %v394, 2147483648
        %v459 = vmul.f32 %v458, 1.442695
        %v460 = vpow.pop %v459
        %v461 = vadd.f32 %v460, 1.0
        %v462 = vrcp.pop %v461
        %v463 = vmul.f32 1.0, %v462
        %v464 = vmax.f32 %v453, 0.0
        %v465 = vsub.f32 %v464, %v326
        %v466 = vmul.f32 %v463, %v465
        %v467 = vadd.f32 %v326, %v466
        %468 = vst.msk [vmem:[%s318] sm:$0xff] %vm355, %v467
        %s469 = sand.u32 %s175, 1
        %s470 = scalar_lea.sflag [#allocation4], %s469
        %s471 = sand.u32 %s175, 1
        %s472 = smul.addr %s471, 8
        %s473 = scalar_lea.vmem [#allocation8], %s472
        // Predicated region
        $region53: #{tpu_custom_call.1} parent=39 // pred_check
          %p474 = pneg %p185
        $region54: #{tpu_custom_call.1} parent=39 // pred_check_branch
          %476 = sbr.rel (%p474) target = $region56
        $region55: #{tpu_custom_call.1} parent=39 // pred_region
          %s478 = ssub.s32 128, 128
          %479 = vsyncadd %s470, %s478
          %s480 = sadd.s32 %s27, %s28
          %s481 = smul.addr %s480, 128
          %s482 = scalar_lea.hbm %s5, %s481
          %s484 = sshll.u32 %s473, 4
          %s485 = int_to_ptr.vmem [resolvable:$true] %s484
          %487 = dma.vmem_to_hbm [thread:$0]  %s485, 128, %s482, %s470
        $region56: #{tpu_custom_call.1} parent=39 // pred_fallthru
          _
      $region40: #{tpu_custom_call.1} parent=5 // pred_fallthru
        _
      %p488 = scmp.le.s32.totalorder 2, %s18
      // Predicated region
      $region57: #{tpu_custom_call.1} parent=5 // pred_check
        %p489 = pneg %p488
      $region58: #{tpu_custom_call.1} parent=5 // pred_check_branch
        %491 = sbr.rel (%p489) target = $region60
      $region59: #{tpu_custom_call.1} parent=5 // pred_region
        %s492 = ssub.s32 %s18, 2
        // Predicated region
        $region61: #{tpu_custom_call.1} parent=59 // pred_check
          %p493 = pneg %p191
        $region62: #{tpu_custom_call.1} parent=59 // pred_check_branch
          %495 = sbr.rel (%p493) target = $region64
        $region63: #{tpu_custom_call.1} parent=59 // pred_region
          %s496 = sand.u32 %s176, 1
          %s497 = scalar_lea.sflag [#allocation4], %s496
          %s498 = sand.u32 %s176, 1
          %s499 = smul.addr %s498, 8
          %s500 = scalar_lea.vmem [#allocation8], %s499
          %501 = dma.done %s497, 128
        $region64: #{tpu_custom_call.1} parent=59 // pred_fallthru
          _
      $region60: #{tpu_custom_call.1} parent=5 // pred_fallthru
        _
    $region6: #{tpu_custom_call.1} parent=1 // loop_footer
      %s22 = sadd.s32 1, %s18
    $region7: #{tpu_custom_call.1} parent=1 // loop_footer_branch
      %17 = sbr.rel target = $region3
    $region8: #{tpu_custom_call.1} parent=1 // loop_exit
      _
    %502 = vsyncpa [#allocation3], 1
    %s503 = scalar_lea.sflag [#allocation3], 1
    %504 = vsyncpa %s503, 1
    %505 = vsyncpa [#allocation6], 1
    %506 = vsyncpa [#allocation4], 1
    %s507 = scalar_lea.sflag [#allocation4], 1
    %508 = vsyncpa %s507, 1

</llo_original>
